<compile_context>
chip_gen: v6e
topology: v6e:2x2x1
jax: 0.10.0
libtpu: 0.0.40
codegen_flags: <defaults>
</compile_context>

<pallas_src>
import jax
import jax.numpy as jnp
from jax.experimental import pallas as pl
from jax.experimental.pallas import tpu as pltpu

GATE_CHANNELS = 16  # == T (dim 2 of the NCDHW input)


def _scale_blocked_kernel(x_ref, s_ref, o_ref):
    """Fast path: one (b, t, hw-tile) block; permute lives in the BlockSpecs.

    x_ref: VMEM (1, C, hw_tile)     slice of x viewed as (B, C, T*HW)
    s_ref: SMEM (B, T) float32      sigmoid gates (whole array, scalar reads)
    o_ref: VMEM (1, 1, C, hw_tile)  slice of the permuted (B, T, C, HW) output
    """
    b = pl.program_id(0)
    t = pl.program_id(1)
    o_ref[0, 0] = (x_ref[0] * s_ref[b, t]).astype(o_ref.dtype)


def _scale_permute_kernel(x_ref, s_ref, o_ref):
    """Fallback (HW % 128 != 0): in-kernel C<->T swap on a (b, hw-tile) block.

    x_ref: VMEM (1, C, T, hw_tile)  native (B, C, T, HW) layout
    s_ref: SMEM (B, T) float32
    o_ref: VMEM (1, T, C, hw_tile)  permuted (B, T, C, HW) layout
    """
    b = pl.program_id(0)
    T = x_ref.shape[2]
    for t in range(T):                                   # static unroll, T == 16
        row = x_ref[0, :, t, :]                          # (C, hw_tile)
        o_ref[0, t] = (row * s_ref[b, t]).astype(o_ref.dtype)


def channel_gate_layer1(x, w1, b1, w2, b2, *, target_block_bytes=4 * 1024 * 1024):
    """x: (B, C, T, H, W) with T == 16. Returns (B, T, C, H, W), like the PyTorch forward."""
    B, C, T, H, W = x.shape
    assert T == GATE_CHANNELS
    HW = H * W
    elem = jnp.dtype(x.dtype).itemsize

    # ---------------- Phase 1: pooled max -> MLP -> sigmoid (plain JAX) ----------------
    # NOTE: scale uses ONLY the 'max' (last) pool branch, matching the PyTorch module.
    x4 = x.reshape(B, C, T, HW)                               # free reshape
    pooled = jnp.max(x4, axis=(1, 3)).astype(jnp.float32)     # (B, T)
    h = jnp.maximum(pooled @ w1.T + b1, 0.0)                  # (B, 8)
    z = h @ w2.T + b2                                         # (B, T)
    scale = jax.nn.sigmoid(z).astype(jnp.float32)             # (B, T), gate in f32 (SMEM)

    out_shape = jax.ShapeDtypeStruct((B, T, C, HW), x.dtype)
    vmem_limit = 32 * 1024 * 1024                             # safe on v5e/v6e/v7x

    if HW % 128 == 0:
        # -------- Fast path: permute folded into grid/BlockSpec, exact tiling --------
        n128 = HW // 128
        hw_tile = 128
        for d in range(1, n128 + 1):                          # largest 128-multiple divisor
            if n128 % d == 0 and C * (128 * d) * elem <= target_block_bytes:
                hw_tile = 128 * d
        n_hw = HW // hw_tile                                  # exact, no masked edge
        x3 = x4.reshape(B, C, T * HW)                         # free reshape

        out4 = pl.pallas_call(
            _scale_blocked_kernel,
            out_shape=out_shape,
            grid=(B, T, n_hw),
            in_specs=[
                # native layout; DMA gathers C runs of hw_tile*elem (>= 512 B) each.
                pl.BlockSpec((1, C, hw_tile),
                             lambda b, t, s: (b, 0, t * n_hw + s)),
                # gate values: whole (B, T) array in SMEM, scalar reads in-kernel.
                pl.BlockSpec(memory_space=pltpu.MemorySpace.SMEM),
            ],
            # output already permuted; full-tile, unmasked, lane-dense stores.
            out_specs=pl.BlockSpec((1, 1, C, hw_tile),
                                   lambda b, t, s: (b, t, 0, s)),
            compiler_params=pltpu.CompilerParams(
                dimension_semantics=("parallel", "parallel", "parallel"),
                vmem_limit_bytes=vmem_limit,
            ),
        )(x3, scale)
    else:
        # -------- Fallback: in-kernel swap, masked edge blocks (odd spatial sizes) ----
        full_block_bytes = C * T * HW * elem
        if full_block_bytes <= target_block_bytes or HW <= 128:
            hw_tile = HW                                      # full last dim (always legal)
        else:
            hw_tile = (target_block_bytes // (C * T * elem)) // 128 * 128
            hw_tile = max(128, min(hw_tile, HW))
        n_hw = pl.cdiv(HW, hw_tile)

        out4 = pl.pallas_call(
            _scale_permute_kernel,
            out_shape=out_shape,
            grid=(B, n_hw),
            in_specs=[
                pl.BlockSpec((1, C, T, hw_tile), lambda b, s: (b, 0, 0, s)),
                pl.BlockSpec(memory_space=pltpu.MemorySpace.SMEM),
            ],
            out_specs=pl.BlockSpec((1, T, C, hw_tile), lambda b, s: (b, 0, 0, s)),
            compiler_params=pltpu.CompilerParams(
                dimension_semantics=("parallel", "parallel"),
                vmem_limit_bytes=vmem_limit,
            ),
        )(x4, scale)

    return out4.reshape(B, T, C, H, W)                        # free reshape


def _reference(x, w1, b1, w2, b2):
    """Pure-JAX mirror of the PyTorch forward (for verification)."""
    xp = jnp.transpose(x, (0, 2, 1, 3, 4))                    # (B, T, C, H, W)
    B, T = xp.shape[0], xp.shape[1]
    flat = xp.reshape(B, T, -1)
    max_pool = jnp.max(flat, axis=-1)                         # (B, T)  ('max' branch)
    h = jnp.maximum(max_pool.astype(jnp.float32) @ w1.T + b1, 0.0)
    z = h @ w2.T + b2
    scale = jax.nn.sigmoid(z)[:, :, None, None, None]
    return xp * scale


if __name__ == "__main__":
    key = jax.random.PRNGKey(0)
    kx1, kx2, kx3, k1, k2, k3, k4 = jax.random.split(key, 7)

    gc = GATE_CHANNELS
    # Deterministic "PyTorch-like" init: U(-1/sqrt(fan_in), 1/sqrt(fan_in)).
    bound1 = 1.0 / jnp.sqrt(gc)
    bound2 = 1.0 / jnp.sqrt(gc // 2)
    w1 = jax.random.uniform(k1, (gc // 2, gc), jnp.float32, -bound1, bound1)
    b1 = jax.random.uniform(k2, (gc // 2,), jnp.float32, -bound1, bound1)
    w2 = jax.random.uniform(k3, (gc, gc // 2), jnp.float32, -bound2, bound2)
    b2 = jax.random.uniform(k4, (gc,), jnp.float32, -bound2, bound2)

    gate = jax.jit(channel_gate_layer1, static_argnames=("target_block_bytes",))

    # --- Test 1: fast path, HW multiple of 128, single hw-tile (grid = (2, 16, 1)). ---
    B, C, T, H, W = 2, 4, gc, 8, 16           # HW = 128
    x = jax.random.normal(kx1, (B, C, T, H, W), dtype=jnp.float32)
    out = jax.block_until_ready(gate(x, w1, b1, w2, b2))
    ref = _reference(x, w1, b1, w2, b2)
    assert out.shape == (B, T, C, H, W)
    assert jnp.allclose(out, ref, atol=1e-5, rtol=1e-5)

    # --- Test 2: fast path with multiple hw-tiles (HW = 384 -> hw_tile = 128, n_hw = 3). ---
    B2, C2, H2, W2 = 2, 8, 16, 24
    x2 = jax.random.normal(kx2, (B2, C2, gc, H2, W2), dtype=jnp.float32)
    out2 = jax.block_until_ready(
        gate(x2, w1, b1, w2, b2, target_block_bytes=8 * 1024))
    ref2 = _reference(x2, w1, b1, w2, b2)
    assert out2.shape == (B2, gc, C2, H2, W2)
    assert jnp.allclose(out2, ref2, atol=1e-5, rtol=1e-5)

    # --- Test 2b: fast path in bf16 (native-dtype multiply, bf16 stores). ---
    x2b = x2.astype(jnp.bfloat16)
    out2b = jax.block_until_ready(gate(x2b, w1, b1, w2, b2))
    ref2b = _reference(x2b, w1, b1, w2, b2)
    assert out2b.dtype == jnp.bfloat16
    assert jnp.allclose(out2b.astype(jnp.float32), ref2b.astype(jnp.float32),
                        atol=2e-2, rtol=2e-2)

    # --- Test 3: fallback path (HW = 200, not a multiple of 128) with masked edge block. ---
    B3, C3, H3, W3 = 2, 4, 10, 20             # HW = 200 -> hw_tile = 128, n_hw = 2 (masked)
    x3 = jax.random.normal(kx3, (B3, C3, gc, H3, W3), dtype=jnp.float32)
    out3 = jax.block_until_ready(
        gate(x3, w1, b1, w2, b2, target_block_bytes=16 * 1024))
    ref3 = _reference(x3, w1, b1, w2, b2)
    assert out3.shape == (B3, gc, C3, H3, W3)
    assert jnp.allclose(out3, ref3, atol=1e-5, rtol=1e-5)

    print("KERNEL_OK")
</pallas_src>

<mosaic_0001>
module attributes {stable_mosaic.version = 11 : i64} {
  func.func @_scale_blocked_kernel(%arg0: i32, %arg1: i32, %arg2: i32, %arg3: memref<1x4x128xf32, #tpu.memory_space<vmem>>, %arg4: memref<2x16xf32, #tpu.memory_space<smem>>, %arg5: memref<1x1x4x128xf32, #tpu.memory_space<vmem>>) attributes {dimension_semantics = [#tpu.dimension_semantics<parallel>, #tpu.dimension_semantics<parallel>, #tpu.dimension_semantics<parallel>], iteration_bounds = array<i64: 2, 16, 1>, scalar_prefetch = 0 : i64, scratch_operands = 0 : i64, tpu.core_type = #tpu.core_type<tc>, window_params = [{transform_indices = @transform_0, window_bounds = array<i64: 1, 4, 128>}, {transform_indices = @transform_1, window_bounds = array<i64: 2, 16>}, {transform_indices = @transform_2, window_bounds = array<i64: 1, 1, 4, 128>}]} {
    %c0 = arith.constant 0 : index
    %c0_0 = arith.constant 0 : index
    %c0_1 = arith.constant 0 : index
    %0 = vector.load %arg3[%c0, %c0_0, %c0_1] : memref<1x4x128xf32, #tpu.memory_space<vmem>>, vector<1x4x128xf32>
    %1 = vector.shape_cast %0 : vector<1x4x128xf32> to vector<4x128xf32>
    %2 = arith.index_cast %arg0 : i32 to index
    %3 = arith.index_cast %arg1 : i32 to index
    %4 = memref.load %arg4[%2, %3] : memref<2x16xf32, #tpu.memory_space<smem>>
    %5 = vector.broadcast %4 : f32 to vector<4x128xf32>
    %6 = arith.mulf %1, %5 : vector<4x128xf32>
    %c0_2 = arith.constant 0 : index
    %c0_3 = arith.constant 0 : index
    %c0_4 = arith.constant 0 : index
    %c0_5 = arith.constant 0 : index
    %7 = vector.load %arg5[%c0_2, %c0_3, %c0_4, %c0_5] : memref<1x1x4x128xf32, #tpu.memory_space<vmem>>, vector<1x1x4x128xf32>
    %8 = vector.shape_cast %7 : vector<1x1x4x128xf32> to vector<4x128xf32>
    %9 = vector.shape_cast %6 : vector<4x128xf32> to vector<1x1x4x128xf32>
    tpu.vector_store %arg5[%c0_2, %c0_3, %c0_4, %c0_5], %9 {strides = array<i32>} : memref<1x1x4x128xf32, #tpu.memory_space<vmem>>, vector<1x1x4x128xf32>,
    return
  }
  func.func @transform_0(%arg0: i32, %arg1: i32, %arg2: i32) -> (i32, i32, i32) {
    %c1_i32 = arith.constant 1 : i32
    %0 = arith.muli %arg1, %c1_i32 : i32
    %1 = arith.addi %0, %arg2 : i32
    %c0_i32 = arith.constant 0 : i32
    %c0_i32_0 = arith.constant 0 : i32
    return %arg0, %c0_i32, %1 : i32, i32, i32
  }
  func.func @transform_1(%arg0: i32, %arg1: i32, %arg2: i32) -> (i32, i32) {
    %c0_i32 = arith.constant 0 : i32
    %c0_i32_0 = arith.constant 0 : i32
    %c0_i32_1 = arith.constant 0 : i32
    return %c0_i32, %c0_i32_0 : i32, i32
  }
  func.func @transform_2(%arg0: i32, %arg1: i32, %arg2: i32) -> (i32, i32, i32, i32) {
    %c0_i32 = arith.constant 0 : i32
    %c0_i32_0 = arith.constant 0 : i32
    return %arg0, %arg1, %c0_i32, %arg2 : i32, i32, i32, i32
  }
}

</mosaic_0001>

<llo_original>
// kernel: channel_gate_layer1.1
$region0: #{channel_gate_layer1.1}
  #allocation0 [shape = 'u32[]', space=smem, size = 0x4, offset = 0x4, fixed_abs, tag = 'smem constant byte address 0x4 - core index']
  #allocation1 [shape = 'u32[144,128]{1,0:T(1,128)}', space=vmem, size = 0x12000, scoped, tag = 'internal scratch']
  %s0 = inlined_call_operand.vmem [shape: f32[2,4,2048], index: 0, kind: input, shape index: {}]
  %s1 = inlined_call_operand.vmem [shape: f32[2,16], index: 1, kind: input, shape index: {}]
  %s2 = inlined_call_operand.vmem [shape: f32[2,16,4,128], index: 2, kind: output, shape index: {}]
  %s3 = sld [smem:[#allocation0]]
  $region45: #{channel_gate_layer1.1} parent=0
    _
  %s5 = ssub.s32 1, %s3
  %s6 = scalar_select 0, %s5, %s3
  $region1: #{channel_gate_layer1.1} parent=0
    #allocation2 [shape = 'u8[1024]{0}', space=smem, size = 0x400, scoped, tag = 'input window, operand 1, single buffered']
    #allocation3 [shape = 's32[2]{0}', space=sflag, size = 0x8, scoped, tag = 'scoped memory for channel_gate_layer1.1']
    %7 = vsyncpa [#allocation3], 0
    loop: start=0, step=1, limit=34
    $region2: #{channel_gate_layer1.1} parent=1 // loop_pre_header
      _
    $region3: #{channel_gate_layer1.1} parent=1 // loop_header
      %s9 = sphi 0, %s13
      %p10 = scmp.ge.s32.totalorder %s9, 34
      %s16 = sphi 0, %s35
      %s17 = sphi 0, %s31
      %s18 = sphi 0, %s27
      %s19 = sphi 0, %s16
      %s20 = sphi 0, %s17
      %s21 = sphi 0, %s18
      %s22 = sphi 0, %s19
      %s23 = sphi 0, %s20
      %s24 = sphi 0, %s21
      %s42 = sphi 0, %s44
      %s45 = sphi 0, %s42
      %s46 = sphi 0, %s45
      %s62 = sphi 0, %s46
      %s66 = sphi 0, %s66
      %s68 = sphi 0, %s66
      %s69 = sphi 0, %s68
      %s83 = sphi 0, %s69
      %s93 = sphi 0, %s95
      %s96 = sphi 0, %s93
      %s97 = sphi 0, %s96
      %s113 = sphi 0, %s97
    $region4: #{channel_gate_layer1.1} parent=1 // loop_header_branch
      %12 = sbr.rel (%p10) target = $region8
    $region5: #{channel_gate_layer1.1} parent=1 // loop_body
      %s14 = ssub.s32 %s9, 1
      %s15 = ssub.s32 %s9, 2
      %s25 = sadd.s32 1, %s18
      %p26 = scmp.ge.s32.totalorder %s25, 1
      %s27 = scalar_select %p26, 0, %s25
      %s28 = sadd.s32 1, %s17
      %s29 = scalar_select %p26, %s28, %s17
      %p30 = scmp.ge.s32.totalorder %s29, 16
      %s31 = scalar_select %p30, 0, %s29
      %s32 = sadd.s32 1, %s16
      %s33 = scalar_select %p30, %s32, %s16
      %p34 = scmp.ge.s32.totalorder %s33, 2
      %s35 = scalar_select %p34, 0, %s33
      %s36 = sadd.s32 %s17, %s18
      %s37 = sadd.s32 %s31, %s27
      %s38 = ssub.s32 %s16, %s35
      %s39 = ssub.s32 %s36, %s37
      %s40 = sor.u32 %s38, %s39
      %p41 = scmp.eq.s32.totalorder %s40, 0
      %s43 = sadd.s32 %s42, 1
      %s44 = scalar_select %p41, %s42, %s43
      %p47 = pneg %p41
      %p48 = scmp.eq.s32.totalorder %s9, 31
      %p49 = por %p47, %p48
      %p50 = scmp.ne.s32.totalorder %s42, %s45
      %p51 = scmp.eq.s32.totalorder %s9, 0
      %p52 = por %p50, %p51
      %p53 = scmp.ne.s32.totalorder %s42, %s45
      %p54 = scmp.eq.s32.totalorder %s14, 31
      %p55 = por %p53, %p54
      %p56 = scmp.ne.s32.totalorder %s45, %s46
      %p57 = scmp.eq.s32.totalorder %s14, 0
      %p58 = por %p56, %p57
      %p59 = scmp.ne.s32.totalorder %s45, %s46
      %p60 = scmp.eq.s32.totalorder %s15, 31
      %p61 = por %p59, %p60
      %p63 = scmp.ne.s32.totalorder %s46, %s62
      %p64 = scmp.eq.s32.totalorder %s15, 0
      %p65 = por %p63, %p64
      %s67 = sadd.s32 %s66, 1
      %p70 = scmp.eq.s32.totalorder %s9, 31
      %p71 = scmp.ne.s32.totalorder %s66, %s68
      %p72 = scmp.eq.s32.totalorder %s9, 0
      %p73 = por %p71, %p72
      %p74 = scmp.ne.s32.totalorder %s66, %s68
      %p75 = scmp.eq.s32.totalorder %s14, 31
      %p76 = por %p74, %p75
      %p77 = scmp.ne.s32.totalorder %s68, %s69
      %p78 = scmp.eq.s32.totalorder %s14, 0
      %p79 = por %p77, %p78
      %p80 = scmp.ne.s32.totalorder %s68, %s69
      %p81 = scmp.eq.s32.totalorder %s15, 31
      %p82 = por %p80, %p81
      %p84 = scmp.ne.s32.totalorder %s69, %s83
      %p85 = scmp.eq.s32.totalorder %s15, 0
      %p86 = por %p84, %p85
      %s87 = ssub.s32 %s16, %s35
      %s88 = ssub.s32 %s17, %s31
      %s89 = sor.u32 %s87, %s88
      %s90 = ssub.s32 %s18, %s27
      %s91 = sor.u32 %s89, %s90
      %p92 = scmp.eq.s32.totalorder %s91, 0
      %s94 = sadd.s32 %s93, 1
      %s95 = scalar_select %p92, %s93, %s94
      %p98 = pneg %p92
      %p99 = scmp.eq.s32.totalorder %s9, 31
      %p100 = por %p98, %p99
      %p101 = scmp.ne.s32.totalorder %s93, %s96
      %p102 = scmp.eq.s32.totalorder %s9, 0
      %p103 = por %p101, %p102
      %p104 = scmp.ne.s32.totalorder %s93, %s96
      %p105 = scmp.eq.s32.totalorder %s14, 31
      %p106 = por %p104, %p105
      %p107 = scmp.ne.s32.totalorder %s96, %s97
      %p108 = scmp.eq.s32.totalorder %s14, 0
      %p109 = por %p107, %p108
      %p110 = scmp.ne.s32.totalorder %s96, %s97
      %p111 = scmp.eq.s32.totalorder %s15, 31
      %p112 = por %p110, %p111
      %p114 = scmp.ne.s32.totalorder %s97, %s113
      %p115 = scmp.eq.s32.totalorder %s15, 0
      %p116 = por %p114, %p115
      %p117 = scmp.le.s32.totalorder 1, %s9
      %p118 = scmp.lt.s32.totalorder %s9, 33
      %p119 = pnand %p117, %p118
      %p120 = pneg %p119
      // Predicated region
      $region9: #{channel_gate_layer1.1} parent=5 // pred_check
        _
      $region10: #{channel_gate_layer1.1} parent=5 // pred_check_branch
        %122 = sbr.rel (%p119) target = $region12
      $region11: #{channel_gate_layer1.1} parent=5 // pred_region
        %s123 = ssub.s32 %s9, 1
        // Predicated region
        $region13: #{channel_gate_layer1.1} parent=11 // pred_check
          %p124 = pneg %p79
        $region14: #{channel_gate_layer1.1} parent=11 // pred_check_branch
          %126 = sbr.rel (%p124) target = $region16
        $region15: #{channel_gate_layer1.1} parent=11 // pred_region
          %s128 = ssub.s32 32, 32
          %129 = vsyncadd [#allocation3], %s128
          %s131 = sshll.u32 %s1, 4
          %s132 = int_to_ptr.vmem [resolvable:$true] %s131
          %134 = dma.vmem_to_smem %s132, 32, [#allocation2], [#allocation3]
        $region16: #{channel_gate_layer1.1} parent=11 // pred_fallthru
          _
      $region12: #{channel_gate_layer1.1} parent=5 // pred_fallthru
        _
      %p135 = scmp.lt.s32.totalorder %s9, 32
      // Predicated region
      $region17: #{channel_gate_layer1.1} parent=5 // pred_check
        %p136 = pneg %p135
      $region18: #{channel_gate_layer1.1} parent=5 // pred_check_branch
        %138 = sbr.rel (%p136) target = $region20
      $region19: #{channel_gate_layer1.1} parent=5 // pred_region
        // Predicated region
        $region21: #{channel_gate_layer1.1} parent=19 // pred_check
          %p139 = pneg %p52
        $region22: #{channel_gate_layer1.1} parent=19 // pred_check_branch
          %141 = sbr.rel (%p139) target = $region24
        $region23: #{channel_gate_layer1.1} parent=19 // pred_region
          %s142 = sadd.s32 %s17, %s18
          %p143 = scmp.lt.s32.totalorder %s16, 1
          %s144 = scalar_select %p143, %s16, 1
          %p145 = scmp.lt.s32.totalorder %s142, 15
          %s146 = scalar_select %p145, %s142, 15
          %s147 = smul.addr %s144, 16
          %s148 = sadd.s32 %s146, %s147
          %s149 = smul.addr %s148, 4
          %s150 = scalar_lea.vmem %s0, %s149
          %s151 = sadd.s32 %s17, %s18
        $region24: #{channel_gate_layer1.1} parent=19 // pred_fallthru
          _
      $region20: #{channel_gate_layer1.1} parent=5 // pred_fallthru
        _
      %p152 = scmp.le.s32.totalorder 1, %s9
      %p153 = scmp.lt.s32.totalorder %s9, 33
      %p154 = pnand %p152, %p153
      %p155 = pneg %p154
      // Predicated region
      $region25: #{channel_gate_layer1.1} parent=5 // pred_check
        _
      $region26: #{channel_gate_layer1.1} parent=5 // pred_check_branch
        %157 = sbr.rel (%p154) target = $region28
      $region27: #{channel_gate_layer1.1} parent=5 // pred_region
        %s158 = ssub.s32 %s9, 1
        // Predicated region
        $region29: #{channel_gate_layer1.1} parent=27 // pred_check
          %p159 = pneg %p79
        $region30: #{channel_gate_layer1.1} parent=27 // pred_check_branch
          %161 = sbr.rel (%p159) target = $region32
        $region31: #{channel_gate_layer1.1} parent=27 // pred_region
          %162 = dma.done [#allocation3], 32
        $region32: #{channel_gate_layer1.1} parent=27 // pred_fallthru
          _
        %163 = sfence
        %s164 = sadd.s32 %s20, %s21
        %p165 = scmp.lt.s32.totalorder %s19, 1
        %s166 = scalar_select %p165, %s19, 1
        %p167 = scmp.lt.s32.totalorder %s164, 15
        %s168 = scalar_select %p167, %s164, 15
        %s169 = smul.addr %s166, 16
        %s170 = sadd.s32 %s168, %s169
        %s171 = smul.addr %s170, 4
        %s172 = scalar_lea.vmem %s0, %s171
        %p173 = pneg %p58
        %p174 = pneg %p55
        %p175 = pneg %p79
        %p176 = pneg %p76
        %p177 = pneg %p109
        %p178 = pneg %p106
        %p179 = scmp.lt.s32.totalorder %s19, 1
        %s180 = scalar_select %p179, %s19, 1
        %p181 = scmp.lt.s32.totalorder %s20, 15
        %s182 = scalar_select %p181, %s20, 15
        %p183 = scmp.lt.s32.totalorder %s21, 0
        %s184 = scalar_select %p183, %s21, 0
        %s185 = sadd.s32 %s184, %s182
        %s186 = smul.addr %s180, 16
        %s187 = sadd.s32 %s185, %s186
        %s188 = smul.addr %s187, 4
        %s189 = scalar_lea.vmem %s2, %s188
        %s190 = sadd.s32 %s20, %s21
        %p191 = scmp.lt.s32.totalorder %s19, 1
        %s192 = scalar_select %p191, %s19, 1
        %p193 = scmp.lt.s32.totalorder %s190, 15
        %s194 = scalar_select %p193, %s190, 15
        %s195 = smul.addr %s192, 16
        %s196 = sadd.s32 %s194, %s195
        %s197 = smul.addr %s196, 4
        %s198 = scalar_lea.vmem %s0, %s197
        %s199 = sadd.s32 %s20, %s21
        %p200 = scmp.lt.s32.totalorder %s19, 1
        %s201 = scalar_select %p200, %s19, 1
        %p202 = scmp.lt.s32.totalorder %s20, 15
        %s203 = scalar_select %p202, %s20, 15
        %p204 = scmp.lt.s32.totalorder %s21, 0
        %s205 = scalar_select %p204, %s21, 0
        %s206 = sadd.s32 %s205, %s203
        %s207 = smul.addr %s201, 16
        %s208 = sadd.s32 %s206, %s207
        %s209 = smul.addr %s208, 4
        %s210 = scalar_lea.vmem %s2, %s209
        %v211 = vld [vmem:[%s198] sm:$0xf]
        %s212 = sshra.s32 %s20, 7
        %s213 = sand.u32 %s20, 127
        %s214 = sadd.s32 %s212, %s19
        %s215 = smul.u32 %s214, 128
        %s216 = sshra.s32 %s20, 7
        %s217 = sand.u32 %s20, 127
        %s218 = sadd.s32 %s215, %s217
        %s219 = sld [smem:[#allocation2 + %s218]]
        %v220 = vstv %s219
        %v221 = vmul.f32 %v211, %v220
        %222 = vst [vmem:[%s210] sm:$0xf] %v221
        %p223 = scmp.lt.s32.totalorder %s19, 1
        %s224 = scalar_select %p223, %s19, 1
        %p225 = scmp.lt.s32.totalorder %s20, 15
        %s226 = scalar_select %p225, %s20, 15
        %p227 = scmp.lt.s32.totalorder %s21, 0
        %s228 = scalar_select %p227, %s21, 0
        %s229 = sadd.s32 %s228, %s226
        %s230 = smul.addr %s224, 16
        %s231 = sadd.s32 %s229, %s230
        %s232 = smul.addr %s231, 4
        %s233 = scalar_lea.vmem %s2, %s232
        // Predicated region
        $region33: #{channel_gate_layer1.1} parent=27 // pred_check
          %p234 = pneg %p106
        $region34: #{channel_gate_layer1.1} parent=27 // pred_check_branch
          %236 = sbr.rel (%p234) target = $region36
        $region35: #{channel_gate_layer1.1} parent=27 // pred_region
          _
        $region36: #{channel_gate_layer1.1} parent=27 // pred_fallthru
          _
      $region28: #{channel_gate_layer1.1} parent=5 // pred_fallthru
        _
      %p237 = scmp.le.s32.totalorder 2, %s9
      // Predicated region
      $region37: #{channel_gate_layer1.1} parent=5 // pred_check
        %p238 = pneg %p237
      $region38: #{channel_gate_layer1.1} parent=5 // pred_check_branch
        %240 = sbr.rel (%p238) target = $region40
      $region39: #{channel_gate_layer1.1} parent=5 // pred_region
        %s241 = ssub.s32 %s9, 2
        // Predicated region
        $region41: #{channel_gate_layer1.1} parent=39 // pred_check
          %p242 = pneg %p112
        $region42: #{channel_gate_layer1.1} parent=39 // pred_check_branch
          %244 = sbr.rel (%p242) target = $region44
        $region43: #{channel_gate_layer1.1} parent=39 // pred_region
          %p245 = scmp.lt.s32.totalorder %s22, 1
          %s246 = scalar_select %p245, %s22, 1
          %p247 = scmp.lt.s32.totalorder %s23, 15
          %s248 = scalar_select %p247, %s23, 15
          %p249 = scmp.lt.s32.totalorder %s24, 0
          %s250 = scalar_select %p249, %s24, 0
          %s251 = sadd.s32 %s250, %s248
          %s252 = smul.addr %s246, 16
          %s253 = sadd.s32 %s251, %s252
          %s254 = smul.addr %s253, 4
          %s255 = scalar_lea.vmem %s2, %s254
        $region44: #{channel_gate_layer1.1} parent=39 // pred_fallthru
          _
      $region40: #{channel_gate_layer1.1} parent=5 // pred_fallthru
        _
    $region6: #{channel_gate_layer1.1} parent=1 // loop_footer
      %s13 = sadd.s32 1, %s9
    $region7: #{channel_gate_layer1.1} parent=1 // loop_footer_branch
      %8 = sbr.rel target = $region3
    $region8: #{channel_gate_layer1.1} parent=1 // loop_exit
      _
    %256 = vsyncpa [#allocation3], 1
    %s257 = scalar_lea.sflag [#allocation3], 1
    %258 = vsyncpa %s257, 1

</llo_original>
